<compile_context>
chip_gen: v5e
topology: v5e:2x2
jax: 0.10.0
libtpu: 0.0.40
codegen_flags: <defaults>
</compile_context>

<pallas_src>
import functools
import math

import jax
import jax.numpy as jnp
from jax.experimental import pallas as pl
from jax.experimental.pallas import tpu as pltpu


def _round_up(x, m):
    return ((x + m - 1) // m) * m


def _matmul_kernel(x_ref, w_ref, o_ref, acc_ref):
    """o[i, j] = sum_k x[i, k] @ w[k, j], accumulated in f32 VMEM scratch."""

    @pl.when(pl.program_id(2) == 0)
    def _init():
        acc_ref[...] = jnp.zeros_like(acc_ref)

    acc_ref[...] += jnp.dot(
        x_ref[...], w_ref[...], preferred_element_type=jnp.float32
    )

    @pl.when(pl.program_id(2) == pl.num_programs(2) - 1)
    def _store():
        o_ref[...] = acc_ref[...].astype(o_ref.dtype)


def prepare_weight(weight, in_features, num_classes, *, tk, tn):
    """One-time layout plumbing: (N, K) f32 -> zero-padded bf16 (K_pad, N_pad)."""
    k_pad = _round_up(in_features, tk)
    n_pad = _round_up(num_classes, tn)
    w_t = weight.T.astype(jnp.bfloat16)  # (K, N)
    w_t = jnp.pad(w_t, ((0, k_pad - in_features), (0, n_pad - num_classes)))
    return w_t


def simple_mlp_forward(x, w_t_padded, num_classes, *, tn=128):
    """x: (B, C, H, W) f32; w_t_padded: (K_pad, N_pad) bf16 from prepare_weight."""
    B = x.shape[0]
    in_features = math.prod(x.shape[1:])
    k_pad, n_pad = w_t_padded.shape

    # Tile sizes (re-derived from shapes; satisfy the (8, 128) rule and keep
    # 2 inputs x 2 buffers x tile + accumulator far below scoped-VMEM limits).
    tm = min(_round_up(B, 16), 256)
    b_pad = _round_up(B, tm)
    tk = min(k_pad, 512)
    tn = min(n_pad, tn)

    # Flatten, cast to bf16, zero-pad sublane (batch) and K to tile multiples.
    x_flat = x.reshape(B, in_features).astype(jnp.bfloat16)
    x_flat = jnp.pad(x_flat, ((0, b_pad - B), (0, k_pad - in_features)))

    grid = (b_pad // tm, n_pad // tn, k_pad // tk)

    cost = pl.CostEstimate(
        flops=2 * b_pad * k_pad * n_pad,
        transcendentals=0,
        bytes_accessed=(x_flat.size * 2 + w_t_padded.size * 2 + b_pad * n_pad * 4),
    )

    out_padded = pl.pallas_call(
        _matmul_kernel,
        out_shape=jax.ShapeDtypeStruct((b_pad, n_pad), jnp.float32),
        grid_spec=pltpu.PrefetchScalarGridSpec(
            num_scalar_prefetch=0,
            grid=grid,
            in_specs=[
                pl.BlockSpec((tm, tk), lambda i, j, k: (i, k)),
                pl.BlockSpec((tk, tn), lambda i, j, k: (k, j)),
            ],
            out_specs=pl.BlockSpec((tm, tn), lambda i, j, k: (i, j)),
            scratch_shapes=[pltpu.VMEM((tm, tn), jnp.float32)],
        ),
        compiler_params=pltpu.CompilerParams(
            dimension_semantics=("parallel", "parallel", "arbitrary"),
        ),
        cost_estimate=cost,
    )(x_flat, w_t_padded)

    # Strip the lane / sublane padding.
    return out_padded[:B, :num_classes]


if __name__ == "__main__":
    # Shapes consistent with the module: input_shape=(4, 16, 16), 10 classes.
    B, C, H, W = 2, 4, 16, 16
    num_classes = 10
    in_features = C * H * W

    key = jax.random.PRNGKey(0)
    kx, kw = jax.random.split(key)
    x = jax.random.normal(kx, (B, C, H, W), dtype=jnp.float32)
    # Deterministic weight init (uniform, like nn.Linear's kaiming-uniform range).
    bound = 1.0 / math.sqrt(in_features)
    weight = jax.random.uniform(
        kw, (num_classes, in_features), minval=-bound, maxval=bound,
        dtype=jnp.float32,
    )

    # One-time weight prep (transpose + pad + bf16 cast), outside the hot path.
    tk = min(_round_up(in_features, 128), 512)
    w_t_padded = prepare_weight(weight, in_features, num_classes, tk=tk, tn=128)

    fwd = jax.jit(functools.partial(simple_mlp_forward, num_classes=num_classes))
    out = fwd(x, w_t_padded)
    jax.block_until_ready(out)

    assert out.shape == (B, num_classes)

    # Tight check vs. a bf16-input / f32-accumulate reference (same precision).
    ref_bf16 = jnp.dot(
        x.reshape(B, -1).astype(jnp.bfloat16),
        weight.T.astype(jnp.bfloat16),
        preferred_element_type=jnp.float32,
    )
    assert jnp.allclose(out, ref_bf16, atol=1e-3, rtol=1e-3)

    # Loose sanity check vs. the exact f32 PyTorch-equivalent math
    # (difference is purely the bf16 operand cast).
    ref_f32 = x.reshape(B, -1) @ weight.T
    assert jnp.allclose(out, ref_f32, atol=5e-2, rtol=5e-2)

    print("KERNEL_OK")
</pallas_src>

<mosaic_0001>
module attributes {stable_mosaic.version = 11 : i64} {
  func.func @_matmul_kernel(%arg0: i32, %arg1: i32, %arg2: i32, %arg3: memref<16x512xbf16, #tpu.memory_space<vmem>>, %arg4: memref<512x128xbf16, #tpu.memory_space<vmem>>, %arg5: memref<16x128xf32, #tpu.memory_space<vmem>>, %arg6: memref<16x128xf32, #tpu.memory_space<vmem>>) attributes {dimension_semantics = [#tpu.dimension_semantics<parallel>, #tpu.dimension_semantics<parallel>, #tpu.dimension_semantics<arbitrary>], iteration_bounds = array<i64: 1, 1, 2>, scalar_prefetch = 0 : i64, scratch_operands = 1 : i64, tpu.core_type = #tpu.core_type<tc>, window_params = [{transform_indices = @transform_0, window_bounds = array<i64: 16, 512>}, {transform_indices = @transform_1, window_bounds = array<i64: 512, 128>}, {transform_indices = @transform_2, window_bounds = array<i64: 16, 128>}]} {
    %c0_i32 = arith.constant 0 : i32
    %0 = arith.cmpi eq, %arg2, %c0_i32 : i32
    %1 = arith.extui %0 : i1 to i32
    %c0_i32_0 = arith.constant 0 : i32
    %2 = arith.cmpi ne, %1, %c0_i32_0 : i32
    scf.if %2 {
      %cst_9 = arith.constant 0.000000e+00 : f32
      %12 = vector.broadcast %cst_9 : f32 to vector<16x128xf32>
      %c0_10 = arith.constant 0 : index
      %c0_11 = arith.constant 0 : index
      %13 = vector.load %arg6[%c0_10, %c0_11] : memref<16x128xf32, #tpu.memory_space<vmem>>, vector<16x128xf32>
      tpu.vector_store %arg6[%c0_10, %c0_11], %12 {strides = array<i32>} : memref<16x128xf32, #tpu.memory_space<vmem>>, vector<16x128xf32>,
    } else {
    }
    %c0 = arith.constant 0 : index
    %c0_1 = arith.constant 0 : index
    %3 = vector.load %arg6[%c0, %c0_1] : memref<16x128xf32, #tpu.memory_space<vmem>>, vector<16x128xf32>
    %c0_2 = arith.constant 0 : index
    %c0_3 = arith.constant 0 : index
    %4 = vector.load %arg3[%c0_2, %c0_3] : memref<16x512xbf16, #tpu.memory_space<vmem>>, vector<16x512xbf16>
    %c0_4 = arith.constant 0 : index
    %c0_5 = arith.constant 0 : index
    %5 = vector.load %arg4[%c0_4, %c0_5] : memref<512x128xbf16, #tpu.memory_space<vmem>>, vector<512x128xbf16>
    %cst = arith.constant dense<0.000000e+00> : vector<16x128xf32>
    %6 = tpu.matmul %4, %5, %cst {dimension_numbers = #tpu.dot_dimension_numbers<[1], [0], [0], [1], [0, 0, 1, 1], [], []>} : vector<16x512xbf16>, vector<512x128xbf16>, vector<16x128xf32> -> vector<16x128xf32>
    %7 = arith.addf %3, %6 : vector<16x128xf32>
    %c0_6 = arith.constant 0 : index
    %c0_7 = arith.constant 0 : index
    %8 = vector.load %arg6[%c0_6, %c0_7] : memref<16x128xf32, #tpu.memory_space<vmem>>, vector<16x128xf32>
    tpu.vector_store %arg6[%c0_6, %c0_7], %7 {strides = array<i32>} : memref<16x128xf32, #tpu.memory_space<vmem>>, vector<16x128xf32>,
    %c1_i32 = arith.constant 1 : i32
    %9 = arith.cmpi eq, %arg2, %c1_i32 : i32
    %10 = arith.extui %9 : i1 to i32
    %c0_i32_8 = arith.constant 0 : i32
    %11 = arith.cmpi ne, %10, %c0_i32_8 : i32
    scf.if %11 {
      %c0_9 = arith.constant 0 : index
      %c0_10 = arith.constant 0 : index
      %12 = vector.load %arg6[%c0_9, %c0_10] : memref<16x128xf32, #tpu.memory_space<vmem>>, vector<16x128xf32>
      %c0_11 = arith.constant 0 : index
      %c0_12 = arith.constant 0 : index
      %13 = vector.load %arg5[%c0_11, %c0_12] : memref<16x128xf32, #tpu.memory_space<vmem>>, vector<16x128xf32>
      tpu.vector_store %arg5[%c0_11, %c0_12], %12 {strides = array<i32>} : memref<16x128xf32, #tpu.memory_space<vmem>>, vector<16x128xf32>,
    } else {
    }
    return
  }
  func.func @transform_0(%arg0: i32, %arg1: i32, %arg2: i32) -> (i32, i32) {
    %c0_i32 = arith.constant 0 : i32
    return %arg0, %arg2 : i32, i32
  }
  func.func @transform_1(%arg0: i32, %arg1: i32, %arg2: i32) -> (i32, i32) {
    %c0_i32 = arith.constant 0 : i32
    return %arg2, %arg1 : i32, i32
  }
  func.func @transform_2(%arg0: i32, %arg1: i32, %arg2: i32) -> (i32, i32) {
    %c0_i32 = arith.constant 0 : i32
    return %arg0, %arg1 : i32, i32
  }
}

</mosaic_0001>

<llo_original>
// kernel: simple_mlp_forward.1
$region0: #{simple_mlp_forward.1}
  #allocation0 [shape = 'u32[]', space=smem, size = 0x4, offset = 0x4, fixed_abs, tag = 'smem constant byte address 0x4 - core index']
  #allocation1 [shape = 'u32[72,128]{1,0:T(1,128)}', space=vmem, size = 0x9000, scoped, tag = 'internal scratch']
  #allocation2 [shape = 'f32[16,128]{1,0:T(8,128)}', space=vmem, size = 0x2000, scoped, tag = 'scratch operand']
  %s0 = inlined_call_operand.vmem [shape: bf16[16,1024], index: 0, kind: input, shape index: {}]
  %s1 = inlined_call_operand.hbm [shape: bf16[1024,128], index: 1, kind: input, shape index: {}]
  %s2 = inlined_call_operand.vmem [shape: f32[16,128], index: 2, kind: output, shape index: {}]
  %s3 = sld [smem:[#allocation0]]
  $region76: #{simple_mlp_forward.1} parent=0
    _
  %s5 = ssub.s32 1, %s3
  %s6 = scalar_select 0, %s5, %s3
  $region1: #{simple_mlp_forward.1} parent=0
    #allocation3 [shape = 'u8[32768]{0}', space=vmem, size = 0x8000, scoped, tag = 'input window, operand 0']
    #allocation4 [shape = 'u8[262144]{0}', space=vmem, size = 0x40000, scoped, tag = 'input window, operand 1']
    #allocation5 [shape = 's32[2]{0}', space=sflag, size = 0x8, scoped, tag = 'scoped memory for simple_mlp_forward.1']
    %7 = vsyncpa [#allocation5], 0
    %s8 = scalar_lea.sflag [#allocation5], 1
    %9 = vsyncpa %s8, 0
    loop: start=0, step=1, limit=4
    $region2: #{simple_mlp_forward.1} parent=1 // loop_pre_header
      _
    $region3: #{simple_mlp_forward.1} parent=1 // loop_header
      %s11 = sphi 0, %s15
      %p12 = scmp.ge.s32.totalorder %s11, 4
      %s18 = sphi 0, %s37
      %s19 = sphi 0, %s33
      %s20 = sphi 0, %s29
      %s21 = sphi 0, %s18
      %s22 = sphi 0, %s19
      %s23 = sphi 0, %s20
      %s24 = sphi 0, %s21
      %s25 = sphi 0, %s22
      %s26 = sphi 0, %s23
      %s42 = sphi 0, %s44
      %s45 = sphi 0, %s42
      %s46 = sphi 0, %s45
      %s62 = sphi 0, %s46
      %s70 = sphi 0, %s72
      %s73 = sphi 0, %s70
      %s74 = sphi 0, %s73
      %s90 = sphi 0, %s74
      %s98 = sphi 0, %s100
      %s101 = sphi 0, %s98
      %s102 = sphi 0, %s101
      %s118 = sphi 0, %s102
    $region4: #{simple_mlp_forward.1} parent=1 // loop_header_branch
      %14 = sbr.rel (%p12) target = $region8
    $region5: #{simple_mlp_forward.1} parent=1 // loop_body
      %s16 = ssub.s32 %s11, 1
      %s17 = ssub.s32 %s11, 2
      %s27 = sadd.s32 1, %s20
      %p28 = scmp.ge.s32.totalorder %s27, 2
      %s29 = scalar_select %p28, 0, %s27
      %s30 = sadd.s32 1, %s19
      %s31 = scalar_select %p28, %s30, %s19
      %p32 = scmp.ge.s32.totalorder %s31, 1
      %s33 = scalar_select %p32, 0, %s31
      %s34 = sadd.s32 1, %s18
      %s35 = scalar_select %p32, %s34, %s18
      %p36 = scmp.ge.s32.totalorder %s35, 1
      %s37 = scalar_select %p36, 0, %s35
      %s38 = ssub.s32 %s18, %s37
      %s39 = ssub.s32 %s20, %s29
      %s40 = sor.u32 %s38, %s39
      %p41 = scmp.eq.s32.totalorder %s40, 0
      %s43 = sadd.s32 %s42, 1
      %s44 = scalar_select %p41, %s42, %s43
      %p47 = pneg %p41
      %p48 = scmp.eq.s32.totalorder %s11, 1
      %p49 = por %p47, %p48
      %p50 = scmp.ne.s32.totalorder %s42, %s45
      %p51 = scmp.eq.s32.totalorder %s11, 0
      %p52 = por %p50, %p51
      %p53 = scmp.ne.s32.totalorder %s42, %s45
      %p54 = scmp.eq.s32.totalorder %s16, 1
      %p55 = por %p53, %p54
      %p56 = scmp.ne.s32.totalorder %s45, %s46
      %p57 = scmp.eq.s32.totalorder %s16, 0
      %p58 = por %p56, %p57
      %p59 = scmp.ne.s32.totalorder %s45, %s46
      %p60 = scmp.eq.s32.totalorder %s17, 1
      %p61 = por %p59, %p60
      %p63 = scmp.ne.s32.totalorder %s46, %s62
      %p64 = scmp.eq.s32.totalorder %s17, 0
      %p65 = por %p63, %p64
      %s66 = ssub.s32 %s20, %s29
      %s67 = ssub.s32 %s19, %s33
      %s68 = sor.u32 %s66, %s67
      %p69 = scmp.eq.s32.totalorder %s68, 0
      %s71 = sadd.s32 %s70, 1
      %s72 = scalar_select %p69, %s70, %s71
      %p75 = pneg %p69
      %p76 = scmp.eq.s32.totalorder %s11, 1
      %p77 = por %p75, %p76
      %p78 = scmp.ne.s32.totalorder %s70, %s73
      %p79 = scmp.eq.s32.totalorder %s11, 0
      %p80 = por %p78, %p79
      %p81 = scmp.ne.s32.totalorder %s70, %s73
      %p82 = scmp.eq.s32.totalorder %s16, 1
      %p83 = por %p81, %p82
      %p84 = scmp.ne.s32.totalorder %s73, %s74
      %p85 = scmp.eq.s32.totalorder %s16, 0
      %p86 = por %p84, %p85
      %p87 = scmp.ne.s32.totalorder %s73, %s74
      %p88 = scmp.eq.s32.totalorder %s17, 1
      %p89 = por %p87, %p88
      %p91 = scmp.ne.s32.totalorder %s74, %s90
      %p92 = scmp.eq.s32.totalorder %s17, 0
      %p93 = por %p91, %p92
      %s94 = ssub.s32 %s18, %s37
      %s95 = ssub.s32 %s19, %s33
      %s96 = sor.u32 %s94, %s95
      %p97 = scmp.eq.s32.totalorder %s96, 0
      %s99 = sadd.s32 %s98, 1
      %s100 = scalar_select %p97, %s98, %s99
      %p103 = pneg %p97
      %p104 = scmp.eq.s32.totalorder %s11, 1
      %p105 = por %p103, %p104
      %p106 = scmp.ne.s32.totalorder %s98, %s101
      %p107 = scmp.eq.s32.totalorder %s11, 0
      %p108 = por %p106, %p107
      %p109 = scmp.ne.s32.totalorder %s98, %s101
      %p110 = scmp.eq.s32.totalorder %s16, 1
      %p111 = por %p109, %p110
      %p112 = scmp.ne.s32.totalorder %s101, %s102
      %p113 = scmp.eq.s32.totalorder %s16, 0
      %p114 = por %p112, %p113
      %p115 = scmp.ne.s32.totalorder %s101, %s102
      %p116 = scmp.eq.s32.totalorder %s17, 1
      %p117 = por %p115, %p116
      %p119 = scmp.ne.s32.totalorder %s102, %s118
      %p120 = scmp.eq.s32.totalorder %s17, 0
      %p121 = por %p119, %p120
      %p122 = scmp.le.s32.totalorder 1, %s11
      %p123 = scmp.lt.s32.totalorder %s11, 3
      %p124 = pnand %p122, %p123
      %p125 = pneg %p124
      // Predicated region
      $region9: #{simple_mlp_forward.1} parent=5 // pred_check
        _
      $region10: #{simple_mlp_forward.1} parent=5 // pred_check_branch
        %127 = sbr.rel (%p124) target = $region12
      $region11: #{simple_mlp_forward.1} parent=5 // pred_region
        %s128 = ssub.s32 %s11, 1
      $region12: #{simple_mlp_forward.1} parent=5 // pred_fallthru
        _
      %p129 = scmp.lt.s32.totalorder %s11, 2
      // Predicated region
      $region13: #{simple_mlp_forward.1} parent=5 // pred_check
        %p130 = pneg %p129
      $region14: #{simple_mlp_forward.1} parent=5 // pred_check_branch
        %132 = sbr.rel (%p130) target = $region16
      $region15: #{simple_mlp_forward.1} parent=5 // pred_region
        // Predicated region
        $region17: #{simple_mlp_forward.1} parent=15 // pred_check
          %p133 = pneg %p52
        $region18: #{simple_mlp_forward.1} parent=15 // pred_check_branch
          %135 = sbr.rel (%p133) target = $region20
        $region19: #{simple_mlp_forward.1} parent=15 // pred_region
          %s136 = sand.u32 %s42, 1
          %s137 = sand.u32 %s42, 1
          %s138 = smul.addr %s137, 32
          %s139 = scalar_lea.vmem [#allocation3], %s138
          %s140 = smul.u32 2, %s18
          %s141 = smul.u32 4, %s20
          %s142 = smul.addr %s140, 8
          %s143 = sadd.s32 %s141, %s142
          %s144 = smul.addr %s143, 4
          %s145 = scalar_lea.vmem %s0, %s144
          // Predicated region
          $region21: #{simple_mlp_forward.1} parent=19 // pred_check
            _
          $region22: #{simple_mlp_forward.1} parent=19 // pred_check_branch
            %147 = sbr.rel (0) target = $region24
          $region23: #{simple_mlp_forward.1} parent=19 // pred_region
            // Predicated region
            $region25: #{simple_mlp_forward.1} parent=23 // pred_check
              _
            $region26: #{simple_mlp_forward.1} parent=23 // pred_check_branch
              %149 = sbr.rel (0) target = $region28
            $region27: #{simple_mlp_forward.1} parent=23 // pred_region
              loop: start=0, step=1, limit=1
              $region29: #{simple_mlp_forward.1} parent=27 // loop_pre_header
                _
              $region30: #{simple_mlp_forward.1} parent=27 // loop_header
                %s151 = sphi 0, %s155
                %p152 = scmp.ge.s32.totalorder %s151, 1
                %s156 = sphi %s145, %s145
                %s157 = sphi %s139, %s139
              $region31: #{simple_mlp_forward.1} parent=27 // loop_header_branch
                %154 = sbr.rel (%p152) target = $region35
              $region32: #{simple_mlp_forward.1} parent=27 // loop_body
                %v158 = vld [vmem:[%s156] sm:$0xff]
                %159 = vst [vmem:[%s157] sm:$0xff] %v158
                %v160 = vld [vmem:[%s156 + $0x8] sm:$0xff]
                %161 = vst [vmem:[%s157 + $0x8] sm:$0xff] %v160
                %v162 = vld [vmem:[%s156 + $0x20] sm:$0xff]
                %163 = vst [vmem:[%s157 + $0x10] sm:$0xff] %v162
                %v164 = vld [vmem:[%s156 + $0x28] sm:$0xff]
                %165 = vst [vmem:[%s157 + $0x18] sm:$0xff] %v164
              $region33: #{simple_mlp_forward.1} parent=27 // loop_footer
                %s155 = sadd.s32 1, %s151
              $region34: #{simple_mlp_forward.1} parent=27 // loop_footer_branch
                %150 = sbr.rel target = $region30
              $region35: #{simple_mlp_forward.1} parent=27 // loop_exit
                _
            $region28: #{simple_mlp_forward.1} parent=23 // pred_fallthru
              _
            // Predicated region
            $region36: #{simple_mlp_forward.1} parent=23 // pred_check
              _
            $region37: #{simple_mlp_forward.1} parent=23 // pred_check_branch
              %167 = sbr.rel target = $region39
            $region38: #{simple_mlp_forward.1} parent=23 // pred_region
              _
            $region39: #{simple_mlp_forward.1} parent=23 // pred_fallthru
              _
          $region24: #{simple_mlp_forward.1} parent=19 // pred_fallthru
            _
          %168 = vnop
        $region20: #{simple_mlp_forward.1} parent=15 // pred_fallthru
          _
        // Predicated region
        $region40: #{simple_mlp_forward.1} parent=15 // pred_check
          %p169 = pneg %p80
        $region41: #{simple_mlp_forward.1} parent=15 // pred_check_branch
          %171 = sbr.rel (%p169) target = $region43
        $region42: #{simple_mlp_forward.1} parent=15 // pred_region
          %s172 = sand.u32 %s70, 1
          %s173 = scalar_lea.sflag [#allocation5], %s172
          %s174 = sand.u32 %s70, 1
          %s175 = smul.addr %s174, 256
          %s176 = scalar_lea.vmem [#allocation4], %s175
          %s177 = smul.u32 64, %s20
          %179 = vsyncadd %s173, 0
          %s180 = sadd.s32 %s19, %s177
          %s181 = smul.addr %s180, 4
          %s182 = scalar_lea.hbm %s1, %s181
          %s183 = sshll.u32 %s182, 4
          %s184 = int_to_ptr.hbm [resolvable:$true] %s183
          %s185 = sshll.u32 %s176, 4
          %s186 = int_to_ptr.vmem [resolvable:$true] %s185
          %191 = dma.hbm_to_vmem [thread:$0]  %s184, 4096, %s186, %s173, 64, 64, 4
        $region43: #{simple_mlp_forward.1} parent=15 // pred_fallthru
          _
      $region16: #{simple_mlp_forward.1} parent=5 // pred_fallthru
        _
      %p192 = scmp.le.s32.totalorder 1, %s11
      %p193 = scmp.lt.s32.totalorder %s11, 3
      %p194 = pnand %p192, %p193
      %p195 = pneg %p194
      // Predicated region
      $region44: #{simple_mlp_forward.1} parent=5 // pred_check
        _
      $region45: #{simple_mlp_forward.1} parent=5 // pred_check_branch
        %197 = sbr.rel (%p194) target = $region47
      $region46: #{simple_mlp_forward.1} parent=5 // pred_region
        %s198 = ssub.s32 %s11, 1
        %s199 = sand.u32 %s45, 1
        %s200 = sand.u32 %s45, 1
        %s201 = smul.addr %s200, 32
        %s202 = scalar_lea.vmem [#allocation3], %s201
        // Predicated region
        $region48: #{simple_mlp_forward.1} parent=46 // pred_check
          %p203 = pneg %p58
        $region49: #{simple_mlp_forward.1} parent=46 // pred_check_branch
          %205 = sbr.rel (%p203) target = $region51
        $region50: #{simple_mlp_forward.1} parent=46 // pred_region
          _
        $region51: #{simple_mlp_forward.1} parent=46 // pred_fallthru
          _
        %s206 = sand.u32 %s73, 1
        %s207 = scalar_lea.sflag [#allocation5], %s206
        %s208 = sand.u32 %s73, 1
        %s209 = smul.addr %s208, 256
        %s210 = scalar_lea.vmem [#allocation4], %s209
        // Predicated region
        $region52: #{simple_mlp_forward.1} parent=46 // pred_check
          %p211 = pneg %p86
        $region53: #{simple_mlp_forward.1} parent=46 // pred_check_branch
          %213 = sbr.rel (%p211) target = $region55
        $region54: #{simple_mlp_forward.1} parent=46 // pred_region
          %215 = dma.done %s207, 4096
        $region55: #{simple_mlp_forward.1} parent=46 // pred_fallthru
          _
        %s216 = sand.u32 %s45, 1
        %s217 = sand.u32 %s45, 1
        %s218 = smul.addr %s217, 32
        %s219 = scalar_lea.vmem [#allocation3], %s218
        %p220 = pneg %p58
        %p221 = pneg %p55
        %s222 = sand.u32 %s73, 1
        %s223 = scalar_lea.sflag [#allocation5], %s222
        %s224 = sand.u32 %s73, 1
        %s225 = smul.addr %s224, 256
        %s226 = scalar_lea.vmem [#allocation4], %s225
        %p227 = pneg %p86
        %p228 = pneg %p83
        %p229 = pneg %p114
        %p230 = pneg %p111
        %s231 = smul.u32 2, %s21
        %p232 = scmp.lt.s32.totalorder %s231, 1
        %s233 = scalar_select %p232, %s231, 1
        %p234 = scmp.lt.s32.totalorder %s22, 0
        %s235 = scalar_select %p234, %s22, 0
        %s236 = sadd.s32 %s235, %s233
        %s237 = smul.addr %s236, 8
        %s238 = scalar_lea.vmem %s2, %s237
        %s239 = smul.u32 2, %s21
        %s240 = smul.u32 4, %s23
        %s241 = smul.u32 64, %s23
        %s242 = smul.u32 2, %s21
        %p243 = scmp.lt.s32.totalorder %s242, 1
        %s244 = scalar_select %p243, %s242, 1
        %p245 = scmp.lt.s32.totalorder %s22, 0
        %s246 = scalar_select %p245, %s22, 0
        %s247 = sadd.s32 %s246, %s244
        %s248 = smul.addr %s247, 8
        %s249 = scalar_lea.vmem %s2, %s248
        %s250 = smul.u32 2, %s21
        %p251 = scmp.eq.s32.totalorder %s23, 0
        // Predicated region
        $region56: #{simple_mlp_forward.1} parent=46 // pred_check
          %p252 = pneg %p251
        $region57: #{simple_mlp_forward.1} parent=46 // pred_check_branch
          %254 = sbr.rel (%p252) target = $region59
        $region58: #{simple_mlp_forward.1} parent=46 // pred_region
          %255 = vst [vmem:[#allocation2] sm:$0xff] 0.0
          %256 = vst [vmem:[#allocation2 + $0x8] sm:$0xff] 0.0
        $region59: #{simple_mlp_forward.1} parent=46 // pred_fallthru
          _
        %v257 = vld [vmem:[#allocation2] sm:$0xff]
        %v258 = vld [vmem:[#allocation2 + $0x8] sm:$0xff]
        %v259 = vld [vmem:[%s202] sm:$0xff]
        %v260 = vld [vmem:[%s202 + $0x8] sm:$0xff]
        %v261 = vld [vmem:[%s202 + $0x10] sm:$0xff]
        %v262 = vld [vmem:[%s202 + $0x18] sm:$0xff]
        %v263 = vld [vmem:[%s210] sm:$0xf]
        %v264 = vld [vmem:[%s210 + $0x4] sm:$0xf]
        %v265 = vld [vmem:[%s210 + $0x8] sm:$0xf]
        %v266 = vld [vmem:[%s210 + $0xc] sm:$0xf]
        %v267 = vld [vmem:[%s210 + $0x10] sm:$0xf]
        %v268 = vld [vmem:[%s210 + $0x14] sm:$0xf]
        %v269 = vld [vmem:[%s210 + $0x18] sm:$0xf]
        %v270 = vld [vmem:[%s210 + $0x1c] sm:$0xf]
        %v271 = vld [vmem:[%s210 + $0x20] sm:$0xf]
        %v272 = vld [vmem:[%s210 + $0x24] sm:$0xf]
        %v273 = vld [vmem:[%s210 + $0x28] sm:$0xf]
        %v274 = vld [vmem:[%s210 + $0x2c] sm:$0xf]
        %v275 = vld [vmem:[%s210 + $0x30] sm:$0xf]
        %v276 = vld [vmem:[%s210 + $0x34] sm:$0xf]
        %v277 = vld [vmem:[%s210 + $0x38] sm:$0xf]
        %v278 = vld [vmem:[%s210 + $0x3c] sm:$0xf]
        %v279 = vld [vmem:[%s210 + $0x40] sm:$0xf]
        %v280 = vld [vmem:[%s210 + $0x44] sm:$0xf]
        %v281 = vld [vmem:[%s210 + $0x48] sm:$0xf]
        %v282 = vld [vmem:[%s210 + $0x4c] sm:$0xf]
        %v283 = vld [vmem:[%s210 + $0x50] sm:$0xf]
        %v284 = vld [vmem:[%s210 + $0x54] sm:$0xf]
        %v285 = vld [vmem:[%s210 + $0x58] sm:$0xf]
        %v286 = vld [vmem:[%s210 + $0x5c] sm:$0xf]
        %v287 = vld [vmem:[%s210 + $0x60] sm:$0xf]
        %v288 = vld [vmem:[%s210 + $0x64] sm:$0xf]
        %v289 = vld [vmem:[%s210 + $0x68] sm:$0xf]
        %v290 = vld [vmem:[%s210 + $0x6c] sm:$0xf]
        %v291 = vld [vmem:[%s210 + $0x70] sm:$0xf]
        %v292 = vld [vmem:[%s210 + $0x74] sm:$0xf]
        %v293 = vld [vmem:[%s210 + $0x78] sm:$0xf]
        %v294 = vld [vmem:[%s210 + $0x7c] sm:$0xf]
        %v295 = vld [vmem:[%s210 + $0x80] sm:$0xf]
        %v296 = vld [vmem:[%s210 + $0x84] sm:$0xf]
        %v297 = vld [vmem:[%s210 + $0x88] sm:$0xf]
        %v298 = vld [vmem:[%s210 + $0x8c] sm:$0xf]
        %v299 = vld [vmem:[%s210 + $0x90] sm:$0xf]
        %v300 = vld [vmem:[%s210 + $0x94] sm:$0xf]
        %v301 = vld [vmem:[%s210 + $0x98] sm:$0xf]
        %v302 = vld [vmem:[%s210 + $0x9c] sm:$0xf]
        %v303 = vld [vmem:[%s210 + $0xa0] sm:$0xf]
        %v304 = vld [vmem:[%s210 + $0xa4] sm:$0xf]
        %v305 = vld [vmem:[%s210 + $0xa8] sm:$0xf]
        %v306 = vld [vmem:[%s210 + $0xac] sm:$0xf]
        %v307 = vld [vmem:[%s210 + $0xb0] sm:$0xf]
        %v308 = vld [vmem:[%s210 + $0xb4] sm:$0xf]
        %v309 = vld [vmem:[%s210 + $0xb8] sm:$0xf]
        %v310 = vld [vmem:[%s210 + $0xbc] sm:$0xf]
        %v311 = vld [vmem:[%s210 + $0xc0] sm:$0xf]
        %v312 = vld [vmem:[%s210 + $0xc4] sm:$0xf]
        %v313 = vld [vmem:[%s210 + $0xc8] sm:$0xf]
        %v314 = vld [vmem:[%s210 + $0xcc] sm:$0xf]
        %v315 = vld [vmem:[%s210 + $0xd0] sm:$0xf]
        %v316 = vld [vmem:[%s210 + $0xd4] sm:$0xf]
        %v317 = vld [vmem:[%s210 + $0xd8] sm:$0xf]
        %v318 = vld [vmem:[%s210 + $0xdc] sm:$0xf]
        %v319 = vld [vmem:[%s210 + $0xe0] sm:$0xf]
        %v320 = vld [vmem:[%s210 + $0xe4] sm:$0xf]
        %v321 = vld [vmem:[%s210 + $0xe8] sm:$0xf]
        %v322 = vld [vmem:[%s210 + $0xec] sm:$0xf]
        %v323 = vld [vmem:[%s210 + $0xf0] sm:$0xf]
        %v324 = vld [vmem:[%s210 + $0xf4] sm:$0xf]
        %v325 = vld [vmem:[%s210 + $0xf8] sm:$0xf]
        %v326 = vld [vmem:[%s210 + $0xfc] sm:$0xf]
        %v331 = vunpack.c.l.b16 %v259
        %v332 = vunpack.c.h.b16 %v259
        %v333 = vunpack.c.l.b16 %v260
        %v334 = vunpack.c.h.b16 %v260
        %v335 = vunpack.c.l.b16 %v261
        %v336 = vunpack.c.h.b16 %v261
        %v337 = vunpack.c.l.b16 %v262
        %v338 = vunpack.c.h.b16 %v262
        %v339 = vpack.c.b16 %v335, %v331
        %v340 = vpack.c.b16 %v336, %v332
        %v341 = vpack.c.b16 %v337, %v333
        %v342 = vpack.c.b16 %v338, %v334
        %v411 = vunpack.c.l.b16 %v263
        %v412 = vunpack.c.l.b16 %v264
        %v413 = vunpack.c.l.b16 %v265
        %v414 = vunpack.c.l.b16 %v266
        %v415 = vunpack.c.l.b16 %v267
        %v416 = vunpack.c.l.b16 %v268
        %v417 = vunpack.c.l.b16 %v269
        %v418 = vunpack.c.l.b16 %v270
        %v419 = vunpack.c.l.b16 %v271
        %v420 = vunpack.c.l.b16 %v272
        %v421 = vunpack.c.l.b16 %v273
        %v422 = vunpack.c.l.b16 %v274
        %v423 = vunpack.c.l.b16 %v275
        %v424 = vunpack.c.l.b16 %v276
        %v425 = vunpack.c.l.b16 %v277
        %v426 = vunpack.c.l.b16 %v278
        %v427 = vunpack.c.l.b16 %v279
        %v428 = vunpack.c.l.b16 %v280
        %v429 = vunpack.c.l.b16 %v281
        %v430 = vunpack.c.l.b16 %v282
        %v431 = vunpack.c.l.b16 %v283
        %v432 = vunpack.c.l.b16 %v284
        %v433 = vunpack.c.l.b16 %v285
        %v434 = vunpack.c.l.b16 %v286
        %v435 = vunpack.c.l.b16 %v287
        %v436 = vunpack.c.l.b16 %v288
        %v437 = vunpack.c.l.b16 %v289
        %v438 = vunpack.c.l.b16 %v290
        %v439 = vunpack.c.l.b16 %v291
        %v440 = vunpack.c.l.b16 %v292
        %v441 = vunpack.c.l.b16 %v293
        %v442 = vunpack.c.l.b16 %v294
        %v443 = vunpack.c.l.b16 %v295
        %v444 = vunpack.c.l.b16 %v296
        %v445 = vunpack.c.l.b16 %v297
        %v446 = vunpack.c.l.b16 %v298
        %v447 = vunpack.c.l.b16 %v299
        %v448 = vunpack.c.l.b16 %v300
        %v449 = vunpack.c.l.b16 %v301
        %v450 = vunpack.c.l.b16 %v302
        %v451 = vunpack.c.l.b16 %v303
        %v452 = vunpack.c.l.b16 %v304
        %v453 = vunpack.c.l.b16 %v305
        %v454 = vunpack.c.l.b16 %v306
        %v455 = vunpack.c.l.b16 %v307
        %v456 = vunpack.c.l.b16 %v308
        %v457 = vunpack.c.l.b16 %v309
        %v458 = vunpack.c.l.b16 %v310
        %v459 = vunpack.c.l.b16 %v311
        %v460 = vunpack.c.l.b16 %v312
        %v461 = vunpack.c.l.b16 %v313
        %v462 = vunpack.c.l.b16 %v314
        %v463 = vunpack.c.l.b16 %v315
        %v464 = vunpack.c.l.b16 %v316
        %v465 = vunpack.c.l.b16 %v317
        %v466 = vunpack.c.l.b16 %v318
        %v467 = vunpack.c.l.b16 %v319
        %v468 = vunpack.c.l.b16 %v320
        %v469 = vunpack.c.l.b16 %v321
        %v470 = vunpack.c.l.b16 %v322
        %v471 = vunpack.c.l.b16 %v323
        %v472 = vunpack.c.l.b16 %v324
        %v473 = vunpack.c.l.b16 %v325
        %v474 = vunpack.c.l.b16 %v326
        %v475 = vpack.c.b16 %v412, %v411
        %v476 = vpack.c.b16 %v414, %v413
        %v477 = vpack.c.b16 %v416, %v415
        %v478 = vpack.c.b16 %v418, %v417
        %v479 = vpack.c.b16 %v420, %v419
        %v480 = vpack.c.b16 %v422, %v421
        %v481 = vpack.c.b16 %v424, %v423
        %v482 = vpack.c.b16 %v426, %v425
        %v483 = vpack.c.b16 %v428, %v427
        %v484 = vpack.c.b16 %v430, %v429
        %v485 = vpack.c.b16 %v432, %v431
        %v486 = vpack.c.b16 %v434, %v433
        %v487 = vpack.c.b16 %v436, %v435
        %v488 = vpack.c.b16 %v438, %v437
        %v489 = vpack.c.b16 %v440, %v439
        %v490 = vpack.c.b16 %v442, %v441
        %v491 = vpack.c.b16 %v444, %v443
        %v492 = vpack.c.b16 %v446, %v445
        %v493 = vpack.c.b16 %v448, %v447
        %v494 = vpack.c.b16 %v450, %v449
        %v495 = vpack.c.b16 %v452, %v451
        %v496 = vpack.c.b16 %v454, %v453
        %v497 = vpack.c.b16 %v456, %v455
        %v498 = vpack.c.b16 %v458, %v457
        %v499 = vpack.c.b16 %v460, %v459
        %v500 = vpack.c.b16 %v462, %v461
        %v501 = vpack.c.b16 %v464, %v463
        %v502 = vpack.c.b16 %v466, %v465
        %v503 = vpack.c.b16 %v468, %v467
        %v504 = vpack.c.b16 %v470, %v469
        %v505 = vpack.c.b16 %v472, %v471
        %v506 = vpack.c.b16 %v474, %v473
        %539 = vmatpush.bf16.msra.mxu0 %v482
        %540 = vmatpush.bf16.msra.mxu0 %v481
        %541 = vmatpush.bf16.msra.mxu0 %v480
        %542 = vmatpush.bf16.msra.mxu0 %v479
        %543 = vmatpush.bf16.msra.mxu0 %v478
        %544 = vmatpush.bf16.msra.mxu0 %v477
        %545 = vmatpush.bf16.msra.mxu0 %v476
        %546 = vmatpush.bf16.msra.mxu0 %v475
        %547 = vmatmul.bf16.gmra.mxu0 %v339
        %v548 = vpop.f32.mrf.mxu0
        %v549 = vadd.f32 0.0, %v548
        %v550 = vpop.f32.mrf.mxu0
        %v551 = vadd.f32 0.0, %v550
        %552 = vdwg.mxu0
        %553 = vmatpush.bf16.msra.mxu0 %v490
        %554 = vmatpush.bf16.msra.mxu0 %v489
        %555 = vmatpush.bf16.msra.mxu0 %v488
        %556 = vmatpush.bf16.msra.mxu0 %v487
        %557 = vmatpush.bf16.msra.mxu0 %v486
        %558 = vmatpush.bf16.msra.mxu0 %v485
        %559 = vmatpush.bf16.msra.mxu0 %v484
        %560 = vmatpush.bf16.msra.mxu0 %v483
        %561 = vmatmul.bf16.gmra.mxu0 %v340
        %v562 = vpop.f32.mrf.mxu0
        %v563 = vadd.f32 %v549, %v562
        %v564 = vpop.f32.mrf.mxu0
        %v565 = vadd.f32 %v551, %v564
        %566 = vdwg.mxu0
        %567 = vmatpush.bf16.msra.mxu0 %v498
        %568 = vmatpush.bf16.msra.mxu0 %v497
        %569 = vmatpush.bf16.msra.mxu0 %v496
        %570 = vmatpush.bf16.msra.mxu0 %v495
        %571 = vmatpush.bf16.msra.mxu0 %v494
        %572 = vmatpush.bf16.msra.mxu0 %v493
        %573 = vmatpush.bf16.msra.mxu0 %v492
        %574 = vmatpush.bf16.msra.mxu0 %v491
        %575 = vmatmul.bf16.gmra.mxu0 %v341
        %v576 = vpop.f32.mrf.mxu0
        %v577 = vadd.f32 %v563, %v576
        %v578 = vpop.f32.mrf.mxu0
        %v579 = vadd.f32 %v565, %v578
        %580 = vdwg.mxu0
        %581 = vmatpush.bf16.msra.mxu0 %v506
        %582 = vmatpush.bf16.msra.mxu0 %v505
        %583 = vmatpush.bf16.msra.mxu0 %v504
        %584 = vmatpush.bf16.msra.mxu0 %v503
        %585 = vmatpush.bf16.msra.mxu0 %v502
        %586 = vmatpush.bf16.msra.mxu0 %v501
        %587 = vmatpush.bf16.msra.mxu0 %v500
        %588 = vmatpush.bf16.msra.mxu0 %v499
        %589 = vmatmul.bf16.gmra.mxu0 %v342
        %v590 = vpop.f32.mrf.mxu0
        %v591 = vadd.f32 %v577, %v590
        %v592 = vpop.f32.mrf.mxu0
        %v593 = vadd.f32 %v579, %v592
        %594 = vdwg.mxu0
        %v595 = vadd.f32 %v257, %v591
        %v596 = vadd.f32 %v258, %v593
        %597 = vst [vmem:[#allocation2] sm:$0xff] %v595
        %598 = vst [vmem:[#allocation2 + $0x8] sm:$0xff] %v596
        %p599 = scmp.eq.s32.totalorder %s23, 1
        // Predicated region
        $region60: #{simple_mlp_forward.1} parent=46 // pred_check
          %p600 = pneg %p599
        $region61: #{simple_mlp_forward.1} parent=46 // pred_check_branch
          %602 = sbr.rel (%p600) target = $region63
        $region62: #{simple_mlp_forward.1} parent=46 // pred_region
          %v603 = vld [vmem:[#allocation2] sm:$0xff]
          %v604 = vld [vmem:[#allocation2 + $0x8] sm:$0xff]
          %605 = vst [vmem:[%s249] sm:$0xff] %v603
          %606 = vst [vmem:[%s249 + $0x8] sm:$0xff] %v604
        $region63: #{simple_mlp_forward.1} parent=46 // pred_fallthru
          _
        %s607 = smul.u32 2, %s21
        %p608 = scmp.lt.s32.totalorder %s607, 1
        %s609 = scalar_select %p608, %s607, 1
        %p610 = scmp.lt.s32.totalorder %s22, 0
        %s611 = scalar_select %p610, %s22, 0
        %s612 = sadd.s32 %s611, %s609
        %s613 = smul.addr %s612, 8
        %s614 = scalar_lea.vmem %s2, %s613
        // Predicated region
        $region64: #{simple_mlp_forward.1} parent=46 // pred_check
          %p615 = pneg %p111
        $region65: #{simple_mlp_forward.1} parent=46 // pred_check_branch
          %617 = sbr.rel (%p615) target = $region67
        $region66: #{simple_mlp_forward.1} parent=46 // pred_region
          %s618 = smul.u32 2, %s21
        $region67: #{simple_mlp_forward.1} parent=46 // pred_fallthru
          _
        // Predicated region
        $region68: #{simple_mlp_forward.1} parent=46 // pred_check
          %p619 = pneg %p111
        $region69: #{simple_mlp_forward.1} parent=46 // pred_check_branch
          %621 = sbr.rel (%p619) target = $region71
        $region70: #{simple_mlp_forward.1} parent=46 // pred_region
          %s622 = smul.u32 2, %s21
          %p623 = scmp.lt.s32.totalorder %s622, 1
          %s624 = scalar_select %p623, %s622, 1
          %p625 = scmp.lt.s32.totalorder %s22, 0
          %s626 = scalar_select %p625, %s22, 0
          %s627 = sadd.s32 %s626, %s624
          %s628 = smul.addr %s627, 8
          %s629 = scalar_lea.vmem %s2, %s628
        $region71: #{simple_mlp_forward.1} parent=46 // pred_fallthru
          _
      $region47: #{simple_mlp_forward.1} parent=5 // pred_fallthru
        _
      %p630 = scmp.le.s32.totalorder 2, %s11
      // Predicated region
      $region72: #{simple_mlp_forward.1} parent=5 // pred_check
        %p631 = pneg %p630
      $region73: #{simple_mlp_forward.1} parent=5 // pred_check_branch
        %633 = sbr.rel (%p631) target = $region75
      $region74: #{simple_mlp_forward.1} parent=5 // pred_region
        %s634 = ssub.s32 %s11, 2
      $region75: #{simple_mlp_forward.1} parent=5 // pred_fallthru
        _
    $region6: #{simple_mlp_forward.1} parent=1 // loop_footer
      %s15 = sadd.s32 1, %s11
    $region7: #{simple_mlp_forward.1} parent=1 // loop_footer_branch
      %10 = sbr.rel target = $region3
    $region8: #{simple_mlp_forward.1} parent=1 // loop_exit
      _
    %635 = vsyncpa [#allocation5], 1
    %s636 = scalar_lea.sflag [#allocation5], 1
    %637 = vsyncpa %s636, 1

</llo_original>
